<compile_context>
chip_gen: v5e
topology: v5e:2x2
jax: 0.10.0
libtpu: 0.0.40
codegen_flags: <defaults>
</compile_context>

<pallas_src>
import functools

import numpy as np
import jax
import jax.numpy as jnp
from jax.experimental import pallas as pl
from jax.experimental.pallas import tpu as pltpu

LANES = 128


def _dice_kernel(x_ref, t_ref, inter_ref, denom_ref, *, C, TN, N, n_j):
    """One grid step: sigmoid + masked one-hot match + per-lane accumulation.

    x_ref    : (C, TN)       logits tile (native dtype)
    t_ref    : (1, TN)       int32 label tile (padded lanes hold C)
    inter_ref: (1, C, LANES) f32 accumulator, sum over lane-groups of p*onehot
    denom_ref: (1, C, LANES) f32 accumulator, sum over lane-groups of p+onehot
    """
    c = pl.program_id(0)   # parallel half (megacore split on v7x)
    j = pl.program_id(1)   # spatial reduction step

    @pl.when(j == 0)
    def _init():
        inter_ref[...] = jnp.zeros_like(inter_ref)
        denom_ref[...] = jnp.zeros_like(denom_ref)

    base = (c * n_j + j) * TN
    lane = jax.lax.broadcasted_iota(jnp.int32, (1, LANES), 1)
    class_idx = jax.lax.broadcasted_iota(jnp.int32, (C, LANES), 0)

    inter_acc = jnp.zeros((C, LANES), jnp.float32)
    denom_acc = jnp.zeros((C, LANES), jnp.float32)

    # Lane-aligned 128-wide chunks: pure VPU accumulation, no per-step XLU sum.
    for g in range(TN // LANES):
        xg = x_ref[:, g * LANES:(g + 1) * LANES].astype(jnp.float32)  # (C,128)
        tg = t_ref[:, g * LANES:(g + 1) * LANES]                      # (1,128)
        pg = jax.nn.sigmoid(xg)
        valid = (base + g * LANES + lane) < N                         # (1,128)
        pg = jnp.where(valid, pg, 0.0)            # mask padded lanes (sigmoid(0)=0.5)
        match = tg == class_idx                   # (C,128) bool, padded labels never match
        inter_acc = inter_acc + jnp.where(match, pg, 0.0)
        denom_acc = denom_acc + pg + match.astype(jnp.float32)

    inter_ref[...] += inter_acc[None]
    denom_ref[...] += denom_acc[None]


def dice_loss_2d(logits, target, epsilon=1e-5):
    """logits: (C, H, W) float; target: (1, H, W) int labels in [0, C).

    Returns (loss, per_channel_dice) matching DiceLoss2D.forward
    (sigmoid normalization path).
    """
    C, H, W = logits.shape
    N = H * W
    x = logits.reshape(C, N)                      # keep native dtype (bf16 ok)
    t = target.reshape(1, N).astype(jnp.int32)

    # Lane-aligned spatial tile, budgeted so double-buffered inputs stay well
    # under the scoped VMEM limit on every generation (incl. v7x's 64 MiB).
    tile_budget = 16 * 1024 * 1024                # bytes for 2x (x_tile + t_tile)
    per_lane = 2 * (C * x.dtype.itemsize + t.dtype.itemsize)
    tn_cap = max(LANES, min(4096, (tile_budget // per_lane) // LANES * LANES))
    TN = min(tn_cap, pl.cdiv(N, LANES) * LANES)   # multiple of 128

    blocks = pl.cdiv(N, TN)
    n_j = pl.cdiv(blocks, 2)                      # 2-way split over parallel axis
    N_pad = 2 * n_j * TN

    if N_pad != N:
        x = jnp.pad(x, ((0, 0), (0, N_pad - N)))
        # Padded labels set to C (out of range) -> never match any class.
        t = jnp.pad(t, ((0, 0), (0, N_pad - N)), constant_values=C)

    kernel = functools.partial(_dice_kernel, C=C, TN=TN, N=N, n_j=n_j)

    inter_p, denom_p = pl.pallas_call(
        kernel,
        out_shape=(
            jax.ShapeDtypeStruct((2, C, LANES), jnp.float32),
            jax.ShapeDtypeStruct((2, C, LANES), jnp.float32),
        ),
        grid_spec=pltpu.PrefetchScalarGridSpec(
            num_scalar_prefetch=0,
            grid=(2, n_j),
            in_specs=[
                pl.BlockSpec((C, TN), lambda c, j: (0, c * n_j + j)),
                pl.BlockSpec((1, TN), lambda c, j: (0, c * n_j + j)),
            ],
            out_specs=[
                pl.BlockSpec((1, C, LANES), lambda c, j: (c, 0, 0)),
                pl.BlockSpec((1, C, LANES), lambda c, j: (c, 0, 0)),
            ],
        ),
        compiler_params=pltpu.CompilerParams(
            dimension_semantics=("parallel", "arbitrary"),
            vmem_limit_bytes=32 * 1024 * 1024,
        ),
    )(x, t)

    # Single final cross-lane reduce, done once on the tiny (2, C, 128) outputs.
    intersect = jnp.sum(inter_p, axis=(0, 2))
    denom = jnp.sum(denom_p, axis=(0, 2))
    per_channel_dice = 2.0 * intersect / jnp.maximum(denom, epsilon)
    loss = jnp.mean(1.0 - per_channel_dice)
    return loss, per_channel_dice


if __name__ == "__main__":
    key = jax.random.PRNGKey(0)
    k1, k2 = jax.random.split(key)

    C, H, W = 4, 16, 16
    logits = jax.random.normal(k1, (C, H, W), dtype=jnp.float32)
    target = jax.random.randint(k2, (1, H, W), 0, C, dtype=jnp.int32)

    loss, dsc = dice_loss_2d(logits, target)
    loss = jax.block_until_ready(loss)
    dsc = jax.block_until_ready(dsc)

    # Pure-JAX reference check of the same math.
    p = jax.nn.sigmoid(logits.reshape(C, -1).astype(jnp.float32))
    onehot = (target.reshape(1, -1) ==
              jnp.arange(C, dtype=jnp.int32)[:, None]).astype(jnp.float32)
    inter_ref = jnp.sum(p * onehot, axis=-1)
    denom_ref = jnp.sum(p + onehot, axis=-1)
    dice_ref = 2.0 * inter_ref / jnp.maximum(denom_ref, 1e-5)
    loss_ref = jnp.mean(1.0 - dice_ref)

    np.testing.assert_allclose(np.asarray(dsc), np.asarray(dice_ref),
                               rtol=1e-5, atol=1e-5)
    np.testing.assert_allclose(np.asarray(loss), np.asarray(loss_ref),
                               rtol=1e-5, atol=1e-5)

    # DSC is returned as a numpy array in the PyTorch module (.cpu().numpy()).
    _ = np.asarray(dsc)
    print("KERNEL_OK")
</pallas_src>

<mosaic_0001>
module attributes {stable_mosaic.version = 11 : i64} {
  func.func @_dice_kernel(%arg0: i32, %arg1: i32, %arg2: memref<4x256xf32, #tpu.memory_space<vmem>>, %arg3: memref<1x256xi32, #tpu.memory_space<vmem>>, %arg4: memref<1x4x128xf32, #tpu.memory_space<vmem>>, %arg5: memref<1x4x128xf32, #tpu.memory_space<vmem>>) attributes {dimension_semantics = [#tpu.dimension_semantics<parallel>, #tpu.dimension_semantics<arbitrary>], iteration_bounds = array<i64: 2, 1>, scalar_prefetch = 0 : i64, scratch_operands = 0 : i64, tpu.core_type = #tpu.core_type<tc>, window_params = [{transform_indices = @transform_0, window_bounds = array<i64: 4, 256>}, {transform_indices = @transform_1, window_bounds = array<i64: 1, 256>}, {transform_indices = @transform_2, window_bounds = array<i64: 1, 4, 128>}, {transform_indices = @transform_3, window_bounds = array<i64: 1, 4, 128>}]} {
    %c0_i32 = arith.constant 0 : i32
    %0 = arith.cmpi eq, %arg1, %c0_i32 : i32
    %1 = arith.extui %0 : i1 to i32
    %c0_i32_0 = arith.constant 0 : i32
    %2 = arith.cmpi ne, %1, %c0_i32_0 : i32
    scf.if %2 {
      %cst_29 = arith.constant 0.000000e+00 : f32
      %68 = vector.broadcast %cst_29 : f32 to vector<1x4x128xf32>
      %c0_30 = arith.constant 0 : index
      %c0_31 = arith.constant 0 : index
      %c0_32 = arith.constant 0 : index
      %69 = vector.load %arg4[%c0_30, %c0_31, %c0_32] : memref<1x4x128xf32, #tpu.memory_space<vmem>>, vector<1x4x128xf32>
      tpu.vector_store %arg4[%c0_30, %c0_31, %c0_32], %68 {strides = array<i32>} : memref<1x4x128xf32, #tpu.memory_space<vmem>>, vector<1x4x128xf32>,
      %cst_33 = arith.constant 0.000000e+00 : f32
      %70 = vector.broadcast %cst_33 : f32 to vector<1x4x128xf32>
      %c0_34 = arith.constant 0 : index
      %c0_35 = arith.constant 0 : index
      %c0_36 = arith.constant 0 : index
      %71 = vector.load %arg5[%c0_34, %c0_35, %c0_36] : memref<1x4x128xf32, #tpu.memory_space<vmem>>, vector<1x4x128xf32>
      tpu.vector_store %arg5[%c0_34, %c0_35, %c0_36], %70 {strides = array<i32>} : memref<1x4x128xf32, #tpu.memory_space<vmem>>, vector<1x4x128xf32>,
    } else {
    }
    %c1_i32 = arith.constant 1 : i32
    %3 = arith.muli %arg0, %c1_i32 : i32
    %4 = arith.addi %3, %arg1 : i32
    %c256_i32 = arith.constant 256 : i32
    %5 = arith.muli %4, %c256_i32 : i32
    %6 = tpu.iota {dimensions = array<i32: 1>} : vector<1x128xi32>
    %7 = tpu.iota {dimensions = array<i32: 0>} : vector<4x128xi32>
    %cst = arith.constant 0.000000e+00 : f32
    %8 = vector.broadcast %cst : f32 to vector<4x128xf32>
    %cst_1 = arith.constant 0.000000e+00 : f32
    %9 = vector.broadcast %cst_1 : f32 to vector<4x128xf32>
    %c0 = arith.constant 0 : index
    %c0_2 = arith.constant 0 : index
    %10 = vector.load %arg2[%c0, %c0_2] : memref<4x256xf32, #tpu.memory_space<vmem>>, vector<4x128xf32>
    %c0_3 = arith.constant 0 : index
    %c0_4 = arith.constant 0 : index
    %11 = vector.load %arg3[%c0_3, %c0_4] : memref<1x256xi32, #tpu.memory_space<vmem>>, vector<1x128xi32>
    %12 = arith.negf %10 : vector<4x128xf32>
    %13 = math.exp %12 : vector<4x128xf32>
    %cst_5 = arith.constant 1.000000e+00 : f32
    %14 = vector.broadcast %cst_5 : f32 to vector<4x128xf32>
    %15 = arith.addf %14, %13 : vector<4x128xf32>
    %16 = arith.divf %14, %15 : vector<4x128xf32>
    %c0_i32_6 = arith.constant 0 : i32
    %17 = arith.addi %5, %c0_i32_6 : i32
    %18 = vector.broadcast %17 : i32 to vector<1x128xi32>
    %19 = arith.addi %18, %6 : vector<1x128xi32>
    %c256_i32_7 = arith.constant 256 : i32
    %20 = vector.broadcast %c256_i32_7 : i32 to vector<1x128xi32>
    %21 = arith.cmpi slt, %19, %20 : vector<1x128xi32>
    %cst_8 = arith.constant 0.000000e+00 : f32
    %22 = vector.shape_cast %21 : vector<1x128xi1> to vector<1x128xi1>
    %23 = vector.broadcast %22 : vector<1x128xi1> to vector<4x128xi1>
    %24 = vector.broadcast %cst_8 : f32 to vector<4x128xf32>
    %25 = arith.select %23, %16, %24 : vector<4x128xi1>, vector<4x128xf32>
    %26 = vector.broadcast %11 : vector<1x128xi32> to vector<4x128xi32>
    %27 = arith.cmpi eq, %26, %7 : vector<4x128xi32>
    %cst_9 = arith.constant 0.000000e+00 : f32
    %28 = vector.broadcast %cst_9 : f32 to vector<4x128xf32>
    %29 = arith.select %27, %25, %28 : vector<4x128xi1>, vector<4x128xf32>
    %30 = arith.addf %8, %29 : vector<4x128xf32>
    %31 = arith.addf %9, %25 : vector<4x128xf32>
    %32 = arith.extui %27 : vector<4x128xi1> to vector<4x128xi32>
    %33 = arith.sitofp %32 : vector<4x128xi32> to vector<4x128xf32>
    %34 = arith.addf %31, %33 : vector<4x128xf32>
    %c0_10 = arith.constant 0 : index
    %c128 = arith.constant 128 : index
    %35 = vector.load %arg2[%c0_10, %c128] : memref<4x256xf32, #tpu.memory_space<vmem>>, vector<4x128xf32>
    %c0_11 = arith.constant 0 : index
    %c128_12 = arith.constant 128 : index
    %36 = vector.load %arg3[%c0_11, %c128_12] : memref<1x256xi32, #tpu.memory_space<vmem>>, vector<1x128xi32>
    %37 = arith.negf %35 : vector<4x128xf32>
    %38 = math.exp %37 : vector<4x128xf32>
    %cst_13 = arith.constant 1.000000e+00 : f32
    %39 = vector.broadcast %cst_13 : f32 to vector<4x128xf32>
    %40 = arith.addf %39, %38 : vector<4x128xf32>
    %41 = arith.divf %39, %40 : vector<4x128xf32>
    %c128_i32 = arith.constant 128 : i32
    %42 = arith.addi %5, %c128_i32 : i32
    %43 = vector.broadcast %42 : i32 to vector<1x128xi32>
    %44 = arith.addi %43, %6 : vector<1x128xi32>
    %c256_i32_14 = arith.constant 256 : i32
    %45 = vector.broadcast %c256_i32_14 : i32 to vector<1x128xi32>
    %46 = arith.cmpi slt, %44, %45 : vector<1x128xi32>
    %cst_15 = arith.constant 0.000000e+00 : f32
    %47 = vector.shape_cast %46 : vector<1x128xi1> to vector<1x128xi1>
    %48 = vector.broadcast %47 : vector<1x128xi1> to vector<4x128xi1>
    %49 = vector.broadcast %cst_15 : f32 to vector<4x128xf32>
    %50 = arith.select %48, %41, %49 : vector<4x128xi1>, vector<4x128xf32>
    %51 = vector.broadcast %36 : vector<1x128xi32> to vector<4x128xi32>
    %52 = arith.cmpi eq, %51, %7 : vector<4x128xi32>
    %cst_16 = arith.constant 0.000000e+00 : f32
    %53 = vector.broadcast %cst_16 : f32 to vector<4x128xf32>
    %54 = arith.select %52, %50, %53 : vector<4x128xi1>, vector<4x128xf32>
    %55 = arith.addf %30, %54 : vector<4x128xf32>
    %56 = arith.addf %34, %50 : vector<4x128xf32>
    %57 = arith.extui %52 : vector<4x128xi1> to vector<4x128xi32>
    %58 = arith.sitofp %57 : vector<4x128xi32> to vector<4x128xf32>
    %59 = arith.addf %56, %58 : vector<4x128xf32>
    %c0_17 = arith.constant 0 : index
    %c0_18 = arith.constant 0 : index
    %c0_19 = arith.constant 0 : index
    %60 = vector.load %arg4[%c0_17, %c0_18, %c0_19] : memref<1x4x128xf32, #tpu.memory_space<vmem>>, vector<1x4x128xf32>
    %61 = vector.shape_cast %55 : vector<4x128xf32> to vector<1x4x128xf32>
    %62 = arith.addf %60, %61 : vector<1x4x128xf32>
    %c0_20 = arith.constant 0 : index
    %c0_21 = arith.constant 0 : index
    %c0_22 = arith.constant 0 : index
    %63 = vector.load %arg4[%c0_20, %c0_21, %c0_22] : memref<1x4x128xf32, #tpu.memory_space<vmem>>, vector<1x4x128xf32>
    tpu.vector_store %arg4[%c0_20, %c0_21, %c0_22], %62 {strides = array<i32>} : memref<1x4x128xf32, #tpu.memory_space<vmem>>, vector<1x4x128xf32>,
    %c0_23 = arith.constant 0 : index
    %c0_24 = arith.constant 0 : index
    %c0_25 = arith.constant 0 : index
    %64 = vector.load %arg5[%c0_23, %c0_24, %c0_25] : memref<1x4x128xf32, #tpu.memory_space<vmem>>, vector<1x4x128xf32>
    %65 = vector.shape_cast %59 : vector<4x128xf32> to vector<1x4x128xf32>
    %66 = arith.addf %64, %65 : vector<1x4x128xf32>
    %c0_26 = arith.constant 0 : index
    %c0_27 = arith.constant 0 : index
    %c0_28 = arith.constant 0 : index
    %67 = vector.load %arg5[%c0_26, %c0_27, %c0_28] : memref<1x4x128xf32, #tpu.memory_space<vmem>>, vector<1x4x128xf32>
    tpu.vector_store %arg5[%c0_26, %c0_27, %c0_28], %66 {strides = array<i32>} : memref<1x4x128xf32, #tpu.memory_space<vmem>>, vector<1x4x128xf32>,
    return
  }
  func.func @transform_0(%arg0: i32, %arg1: i32) -> (i32, i32) {
    %c1_i32 = arith.constant 1 : i32
    %0 = arith.muli %arg0, %c1_i32 : i32
    %1 = arith.addi %0, %arg1 : i32
    %c0_i32 = arith.constant 0 : i32
    %c0_i32_0 = arith.constant 0 : i32
    return %c0_i32, %1 : i32, i32
  }
  func.func @transform_1(%arg0: i32, %arg1: i32) -> (i32, i32) {
    %c1_i32 = arith.constant 1 : i32
    %0 = arith.muli %arg0, %c1_i32 : i32
    %1 = arith.addi %0, %arg1 : i32
    %c0_i32 = arith.constant 0 : i32
    %c0_i32_0 = arith.constant 0 : i32
    return %c0_i32, %1 : i32, i32
  }
  func.func @transform_2(%arg0: i32, %arg1: i32) -> (i32, i32, i32) {
    %c0_i32 = arith.constant 0 : i32
    %c0_i32_0 = arith.constant 0 : i32
    %c0_i32_1 = arith.constant 0 : i32
    return %arg0, %c0_i32, %c0_i32_0 : i32, i32, i32
  }
  func.func @transform_3(%arg0: i32, %arg1: i32) -> (i32, i32, i32) {
    %c0_i32 = arith.constant 0 : i32
    %c0_i32_0 = arith.constant 0 : i32
    %c0_i32_1 = arith.constant 0 : i32
    return %arg0, %c0_i32, %c0_i32_0 : i32, i32, i32
  }
}

</mosaic_0001>

<llo_original>
// kernel: tpu_custom_call.1
$region0: #{tpu_custom_call.1}
  #allocation0 [shape = 'u32[]', space=smem, size = 0x4, offset = 0x4, fixed_abs, tag = 'smem constant byte address 0x4 - core index']
  #allocation1 [shape = 'u32[72,128]{1,0:T(1,128)}', space=vmem, size = 0x9000, scoped, tag = 'internal scratch']
  %s0 = inlined_call_operand.hbm [shape: f32[4,512], index: 0, kind: input, shape index: {}]
  %s1 = inlined_call_operand.hbm [shape: s32[1,512], index: 1, kind: input, shape index: {}]
  %s2 = inlined_call_operand.hbm [shape: f32[2,4,128], index: 2, kind: output, shape index: {0}]
  %s3 = inlined_call_operand.hbm [shape: f32[2,4,128], index: 3, kind: output, shape index: {1}]
  %4 = xla_tuple %s2, %s3
  %s5 = sld [smem:[#allocation0]]
  $region61: #{tpu_custom_call.1} parent=0
    _
  %s7 = ssub.s32 1, %s5
  %s8 = scalar_select 0, %s7, %s5
  $region1: #{tpu_custom_call.1} parent=0
    #allocation2 [shape = 'u8[8192]{0}', space=vmem, size = 0x2000, scoped, tag = 'input window, operand 0']
    #allocation3 [shape = 's32[2]{0}', space=sflag, size = 0x8, scoped, tag = 'scoped memory for tpu_custom_call.1']
    #allocation4 [shape = 's32[2]{0}', space=sflag, size = 0x8, scoped, tag = 'scoped memory for tpu_custom_call.1']
    #allocation5 [shape = 'u8[2048]{0}', space=vmem, size = 0x800, scoped, tag = 'input window, operand 1']
    #allocation6 [shape = 's32[2]{0}', space=sflag, size = 0x8, scoped, tag = 'scoped memory for tpu_custom_call.1']
    #allocation7 [shape = 'u8[4096]{0}', space=vmem, size = 0x1000, scoped, tag = 'output window, operand 0']
    #allocation8 [shape = 'u8[4096]{0}', space=vmem, size = 0x1000, scoped, tag = 'output window, operand 1']
    #allocation9 [shape = 's32[2]{0}', space=sflag, size = 0x8, scoped, tag = 'scoped memory for tpu_custom_call.1']
    %9 = vsyncpa [#allocation3], 0
    %s10 = scalar_lea.sflag [#allocation3], 1
    %11 = vsyncpa %s10, 0
    %12 = vsyncpa [#allocation6], 0
    %s13 = scalar_lea.sflag [#allocation6], 1
    %14 = vsyncpa %s13, 0
    %15 = vsyncpa [#allocation4], 0
    %s16 = scalar_lea.sflag [#allocation4], 1
    %17 = vsyncpa %s16, 0
    %18 = vsyncpa [#allocation9], 0
    %s19 = scalar_lea.sflag [#allocation9], 1
    %20 = vsyncpa %s19, 0
    loop: start=0, step=1, limit=4
    $region2: #{tpu_custom_call.1} parent=1 // loop_pre_header
      _
    $region3: #{tpu_custom_call.1} parent=1 // loop_header
      %s22 = sphi 0, %s26
      %p23 = scmp.ge.s32.totalorder %s22, 4
      %s29 = sphi 0, %s41
      %s30 = sphi 0, %s37
      %s31 = sphi 0, %s29
      %s32 = sphi 0, %s30
      %s33 = sphi 0, %s31
      %s34 = sphi 0, %s32
      %s46 = sphi 0, %s48
      %s49 = sphi 0, %s46
      %s50 = sphi 0, %s49
      %s66 = sphi 0, %s50
      %s74 = sphi 0, %s76
      %s77 = sphi 0, %s74
      %s78 = sphi 0, %s77
      %s94 = sphi 0, %s78
      %s100 = sphi 0, %s102
      %s103 = sphi 0, %s100
      %s104 = sphi 0, %s103
      %s120 = sphi 0, %s104
      %s126 = sphi 0, %s128
      %s129 = sphi 0, %s126
      %s130 = sphi 0, %s129
      %s146 = sphi 0, %s130
    $region4: #{tpu_custom_call.1} parent=1 // loop_header_branch
      %25 = sbr.rel (%p23) target = $region8
    $region5: #{tpu_custom_call.1} parent=1 // loop_body
      %s27 = ssub.s32 %s22, 1
      %s28 = ssub.s32 %s22, 2
      %s35 = sadd.s32 1, %s30
      %p36 = scmp.ge.s32.totalorder %s35, 1
      %s37 = scalar_select %p36, 0, %s35
      %s38 = sadd.s32 1, %s29
      %s39 = scalar_select %p36, %s38, %s29
      %p40 = scmp.ge.s32.totalorder %s39, 2
      %s41 = scalar_select %p40, 0, %s39
      %s42 = sadd.s32 %s29, %s30
      %s43 = sadd.s32 %s41, %s37
      %s44 = ssub.s32 %s42, %s43
      %p45 = scmp.eq.s32.totalorder %s44, 0
      %s47 = sadd.s32 %s46, 1
      %s48 = scalar_select %p45, %s46, %s47
      %p51 = pneg %p45
      %p52 = scmp.eq.s32.totalorder %s22, 1
      %p53 = por %p51, %p52
      %p54 = scmp.ne.s32.totalorder %s46, %s49
      %p55 = scmp.eq.s32.totalorder %s22, 0
      %p56 = por %p54, %p55
      %p57 = scmp.ne.s32.totalorder %s46, %s49
      %p58 = scmp.eq.s32.totalorder %s27, 1
      %p59 = por %p57, %p58
      %p60 = scmp.ne.s32.totalorder %s49, %s50
      %p61 = scmp.eq.s32.totalorder %s27, 0
      %p62 = por %p60, %p61
      %p63 = scmp.ne.s32.totalorder %s49, %s50
      %p64 = scmp.eq.s32.totalorder %s28, 1
      %p65 = por %p63, %p64
      %p67 = scmp.ne.s32.totalorder %s50, %s66
      %p68 = scmp.eq.s32.totalorder %s28, 0
      %p69 = por %p67, %p68
      %s70 = sadd.s32 %s29, %s30
      %s71 = sadd.s32 %s41, %s37
      %s72 = ssub.s32 %s70, %s71
      %p73 = scmp.eq.s32.totalorder %s72, 0
      %s75 = sadd.s32 %s74, 1
      %s76 = scalar_select %p73, %s74, %s75
      %p79 = pneg %p73
      %p80 = scmp.eq.s32.totalorder %s22, 1
      %p81 = por %p79, %p80
      %p82 = scmp.ne.s32.totalorder %s74, %s77
      %p83 = scmp.eq.s32.totalorder %s22, 0
      %p84 = por %p82, %p83
      %p85 = scmp.ne.s32.totalorder %s74, %s77
      %p86 = scmp.eq.s32.totalorder %s27, 1
      %p87 = por %p85, %p86
      %p88 = scmp.ne.s32.totalorder %s77, %s78
      %p89 = scmp.eq.s32.totalorder %s27, 0
      %p90 = por %p88, %p89
      %p91 = scmp.ne.s32.totalorder %s77, %s78
      %p92 = scmp.eq.s32.totalorder %s28, 1
      %p93 = por %p91, %p92
      %p95 = scmp.ne.s32.totalorder %s78, %s94
      %p96 = scmp.eq.s32.totalorder %s28, 0
      %p97 = por %p95, %p96
      %s98 = ssub.s32 %s29, %s41
      %p99 = scmp.eq.s32.totalorder %s98, 0
      %s101 = sadd.s32 %s100, 1
      %s102 = scalar_select %p99, %s100, %s101
      %p105 = pneg %p99
      %p106 = scmp.eq.s32.totalorder %s22, 1
      %p107 = por %p105, %p106
      %p108 = scmp.ne.s32.totalorder %s100, %s103
      %p109 = scmp.eq.s32.totalorder %s22, 0
      %p110 = por %p108, %p109
      %p111 = scmp.ne.s32.totalorder %s100, %s103
      %p112 = scmp.eq.s32.totalorder %s27, 1
      %p113 = por %p111, %p112
      %p114 = scmp.ne.s32.totalorder %s103, %s104
      %p115 = scmp.eq.s32.totalorder %s27, 0
      %p116 = por %p114, %p115
      %p117 = scmp.ne.s32.totalorder %s103, %s104
      %p118 = scmp.eq.s32.totalorder %s28, 1
      %p119 = por %p117, %p118
      %p121 = scmp.ne.s32.totalorder %s104, %s120
      %p122 = scmp.eq.s32.totalorder %s28, 0
      %p123 = por %p121, %p122
      %s124 = ssub.s32 %s29, %s41
      %p125 = scmp.eq.s32.totalorder %s124, 0
      %s127 = sadd.s32 %s126, 1
      %s128 = scalar_select %p125, %s126, %s127
      %p131 = pneg %p125
      %p132 = scmp.eq.s32.totalorder %s22, 1
      %p133 = por %p131, %p132
      %p134 = scmp.ne.s32.totalorder %s126, %s129
      %p135 = scmp.eq.s32.totalorder %s22, 0
      %p136 = por %p134, %p135
      %p137 = scmp.ne.s32.totalorder %s126, %s129
      %p138 = scmp.eq.s32.totalorder %s27, 1
      %p139 = por %p137, %p138
      %p140 = scmp.ne.s32.totalorder %s129, %s130
      %p141 = scmp.eq.s32.totalorder %s27, 0
      %p142 = por %p140, %p141
      %p143 = scmp.ne.s32.totalorder %s129, %s130
      %p144 = scmp.eq.s32.totalorder %s28, 1
      %p145 = por %p143, %p144
      %p147 = scmp.ne.s32.totalorder %s130, %s146
      %p148 = scmp.eq.s32.totalorder %s28, 0
      %p149 = por %p147, %p148
      %p150 = scmp.le.s32.totalorder 1, %s22
      %p151 = scmp.lt.s32.totalorder %s22, 3
      %p152 = pnand %p150, %p151
      %p153 = pneg %p152
      // Predicated region
      $region9: #{tpu_custom_call.1} parent=5 // pred_check
        _
      $region10: #{tpu_custom_call.1} parent=5 // pred_check_branch
        %155 = sbr.rel (%p152) target = $region12
      $region11: #{tpu_custom_call.1} parent=5 // pred_region
        %s156 = ssub.s32 %s22, 1
      $region12: #{tpu_custom_call.1} parent=5 // pred_fallthru
        _
      %p157 = scmp.lt.s32.totalorder %s22, 2
      // Predicated region
      $region13: #{tpu_custom_call.1} parent=5 // pred_check
        %p158 = pneg %p157
      $region14: #{tpu_custom_call.1} parent=5 // pred_check_branch
        %160 = sbr.rel (%p158) target = $region16
      $region15: #{tpu_custom_call.1} parent=5 // pred_region
        // Predicated region
        $region17: #{tpu_custom_call.1} parent=15 // pred_check
          %p161 = pneg %p56
        $region18: #{tpu_custom_call.1} parent=15 // pred_check_branch
          %163 = sbr.rel (%p161) target = $region20
        $region19: #{tpu_custom_call.1} parent=15 // pred_region
          %s164 = sand.u32 %s46, 1
          %s165 = scalar_lea.sflag [#allocation3], %s164
          %s166 = sand.u32 %s46, 1
          %s167 = smul.addr %s166, 8
          %s168 = scalar_lea.vmem [#allocation2], %s167
          %s169 = sadd.s32 %s29, %s30
          %s170 = smul.u32 2, %s169
          %172 = vsyncadd %s165, 0
          %s173 = smul.addr %s170, 4
          %s174 = scalar_lea.hbm %s0, %s173
          %s176 = sshll.u32 %s174, 4
          %s177 = int_to_ptr.hbm [resolvable:$true] %s176
          %s178 = sshll.u32 %s168, 4
          %s179 = int_to_ptr.vmem [resolvable:$true] %s178
          %181 = dma.hbm_to_vmem [thread:$0]  %s177, 128, %s179, %s165
        $region20: #{tpu_custom_call.1} parent=15 // pred_fallthru
          _
        // Predicated region
        $region21: #{tpu_custom_call.1} parent=15 // pred_check
          %p182 = pneg %p84
        $region22: #{tpu_custom_call.1} parent=15 // pred_check_branch
          %184 = sbr.rel (%p182) target = $region24
        $region23: #{tpu_custom_call.1} parent=15 // pred_region
          %s185 = sand.u32 %s74, 1
          %s186 = scalar_lea.sflag [#allocation6], %s185
          %s187 = sand.u32 %s74, 1
          %s188 = smul.addr %s187, 2
          %s189 = scalar_lea.vmem [#allocation5], %s188
          %s190 = sadd.s32 %s29, %s30
          %s191 = smul.u32 2, %s190
          %193 = vsyncadd %s186, 0
          %s194 = scalar_lea.hbm %s1, %s191
          %s196 = sshll.u32 %s194, 4
          %s197 = int_to_ptr.hbm [resolvable:$true] %s196
          %s198 = sshll.u32 %s189, 4
          %s199 = int_to_ptr.vmem [resolvable:$true] %s198
          %201 = dma.hbm_to_vmem [thread:$0]  %s197, 32, %s199, %s186
        $region24: #{tpu_custom_call.1} parent=15 // pred_fallthru
          _
      $region16: #{tpu_custom_call.1} parent=5 // pred_fallthru
        _
      %p202 = scmp.le.s32.totalorder 1, %s22
      %p203 = scmp.lt.s32.totalorder %s22, 3
      %p204 = pnand %p202, %p203
      %p205 = pneg %p204
      // Predicated region
      $region25: #{tpu_custom_call.1} parent=5 // pred_check
        _
      $region26: #{tpu_custom_call.1} parent=5 // pred_check_branch
        %207 = sbr.rel (%p204) target = $region28
      $region27: #{tpu_custom_call.1} parent=5 // pred_region
        %s208 = ssub.s32 %s22, 1
        %s209 = sand.u32 %s49, 1
        %s210 = scalar_lea.sflag [#allocation3], %s209
        %s211 = sand.u32 %s49, 1
        %s212 = smul.addr %s211, 8
        %s213 = scalar_lea.vmem [#allocation2], %s212
        // Predicated region
        $region29: #{tpu_custom_call.1} parent=27 // pred_check
          %p214 = pneg %p62
        $region30: #{tpu_custom_call.1} parent=27 // pred_check_branch
          %216 = sbr.rel (%p214) target = $region32
        $region31: #{tpu_custom_call.1} parent=27 // pred_region
          %218 = dma.done %s210, 128
        $region32: #{tpu_custom_call.1} parent=27 // pred_fallthru
          _
        %s219 = sand.u32 %s77, 1
        %s220 = scalar_lea.sflag [#allocation6], %s219
        %s221 = sand.u32 %s77, 1
        %s222 = smul.addr %s221, 2
        %s223 = scalar_lea.vmem [#allocation5], %s222
        // Predicated region
        $region33: #{tpu_custom_call.1} parent=27 // pred_check
          %p224 = pneg %p90
        $region34: #{tpu_custom_call.1} parent=27 // pred_check_branch
          %226 = sbr.rel (%p224) target = $region36
        $region35: #{tpu_custom_call.1} parent=27 // pred_region
          %228 = dma.done %s220, 32
        $region36: #{tpu_custom_call.1} parent=27 // pred_fallthru
          _
        %s229 = sand.u32 %s49, 1
        %s230 = scalar_lea.sflag [#allocation3], %s229
        %s231 = sand.u32 %s49, 1
        %s232 = smul.addr %s231, 8
        %s233 = scalar_lea.vmem [#allocation2], %s232
        %p234 = pneg %p62
        %p235 = pneg %p59
        %s236 = sand.u32 %s77, 1
        %s237 = scalar_lea.sflag [#allocation6], %s236
        %s238 = sand.u32 %s77, 1
        %s239 = smul.addr %s238, 2
        %s240 = scalar_lea.vmem [#allocation5], %s239
        %p241 = pneg %p90
        %p242 = pneg %p87
        %p243 = pneg %p116
        %p244 = pneg %p113
        %s245 = sand.u32 %s103, 1
        %s246 = scalar_lea.sflag [#allocation4], %s245
        %s247 = sand.u32 %s103, 1
        %s248 = smul.addr %s247, 4
        %s249 = scalar_lea.vmem [#allocation7], %s248
        %p250 = pneg %p142
        %p251 = pneg %p139
        %s252 = sand.u32 %s129, 1
        %s253 = scalar_lea.sflag [#allocation9], %s252
        %s254 = sand.u32 %s129, 1
        %s255 = smul.addr %s254, 4
        %s256 = scalar_lea.vmem [#allocation8], %s255
        %s257 = sadd.s32 %s31, %s32
        %s258 = smul.u32 2, %s257
        %s259 = sadd.s32 %s31, %s32
        %s260 = smul.u32 2, %s259
        %p261 = scmp.eq.s32.totalorder %s32, 0
        // Predicated region
        $region37: #{tpu_custom_call.1} parent=27 // pred_check
          %p262 = pneg %p261
        $region38: #{tpu_custom_call.1} parent=27 // pred_check_branch
          %264 = sbr.rel (%p262) target = $region40
        $region39: #{tpu_custom_call.1} parent=27 // pred_region
          %265 = vst [vmem:[%s249] sm:$0xf] 0.0
          %266 = vst [vmem:[%s256] sm:$0xf] 0.0
        $region40: #{tpu_custom_call.1} parent=27 // pred_fallthru
          _
        %s267 = sadd.s32 %s31, %s32
        %s268 = smul.u32 %s267, 256
        %v269 = vlaneseq
        %v270 = vand.u32 %v269, 127
        %v271 = vlaneseq
        %v272 = vshrl.u32 %v271, 7
        %v273 = vld [vmem:[%s213] sm:$0xf]
        %v274 = vld [vmem:[%s223] sm:$0x1]
        %v275 = vxor.u32 %v273, 2147483648
        %v276 = vmul.f32 %v275, 1.442695
        %v277 = vpow.pop %v276
        %v278 = vadd.f32 %v277, 1.0
        %v279 = vrcp.pop %v278
        %v280 = vmul.f32 %v278, %v279
        %v281 = vsub.f32 1.0, %v280
        %v282 = vmul.f32 %v279, %v281
        %v283 = vadd.f32 %v279, %v282
        %vm284 = vweird.f32 %v278
        %vm285 = vweird.f32 %v279
        %vm286 = vmor %vm284, %vm285
        %v287 = vsel %vm286, %v279, %v283
        %v288 = vand.u32 2147483647, %v278
        %vm289 = vcmp.eq.f32.partialorder %v288, 8.507059e+37
        %v290 = vand.u32 %v278, 2147483648
        %v291 = vor.u32 1.1754944e-38, %v290
        %v292 = vsel %vm289, %v291, %v287
        %v293 = vmul.f32 1.0, %v292
        %v294 = vstv %s268
        %v295 = vadd.s32 %v294, %v270
        %vm296 = vcmp.lt.s32.totalorder %v295, 256
        %v297 = vsel %vm296, 1, 0
        %vm298 = vcmp.eq.s32.totalorder %v297, 1
        %v299 = vsel %vm298, %v293, 0.0
        %v300 = vperm.slane %v274, 0
        %vm301 = vcmp.eq.s32.totalorder %v300, %v272
        %v302 = vsel %vm301, %v299, 0.0
        %v303 = vadd.f32 %v302, 0.0
        %v304 = vadd.f32 %v299, 0.0
        %v305 = vsel %vm301, 1, 0
        %v306 = vcvt.s32.f32 %v305
        %v307 = vadd.f32 %v304, %v306
        %v308 = vld [vmem:[%s213 + $0x4] sm:$0xf]
        %v309 = vld [vmem:[%s223 + $0x1] sm:$0x1]
        %v310 = vxor.u32 %v308, 2147483648
        %v311 = vmul.f32 %v310, 1.442695
        %v312 = vpow.pop %v311
        %v313 = vadd.f32 %v312, 1.0
        %v314 = vrcp.pop %v313
        %v315 = vmul.f32 %v313, %v314
        %v316 = vsub.f32 1.0, %v315
        %v317 = vmul.f32 %v314, %v316
        %v318 = vadd.f32 %v314, %v317
        %vm319 = vweird.f32 %v313
        %vm320 = vweird.f32 %v314
        %vm321 = vmor %vm319, %vm320
        %v322 = vsel %vm321, %v314, %v318
        %v323 = vand.u32 2147483647, %v313
        %vm324 = vcmp.eq.f32.partialorder %v323, 8.507059e+37
        %v325 = vand.u32 %v313, 2147483648
        %v326 = vor.u32 1.1754944e-38, %v325
        %v327 = vsel %vm324, %v326, %v322
        %v328 = vmul.f32 1.0, %v327
        %s329 = sadd.s32 %s268, 128
        %v330 = vstv %s329
        %v331 = vadd.s32 %v330, %v270
        %vm332 = vcmp.lt.s32.totalorder %v331, 256
        %v333 = vsel %vm332, 1, 0
        %vm334 = vcmp.eq.s32.totalorder %v333, 1
        %v335 = vsel %vm334, %v328, 0.0
        %v336 = vperm.slane %v309, 0
        %vm337 = vcmp.eq.s32.totalorder %v336, %v272
        %v338 = vsel %vm337, %v335, 0.0
        %v339 = vadd.f32 %v303, %v338
        %v340 = vadd.f32 %v307, %v335
        %v341 = vsel %vm337, 1, 0
        %v342 = vcvt.s32.f32 %v341
        %v343 = vadd.f32 %v340, %v342
        %v344 = vld [vmem:[%s249] sm:$0xf]
        %v345 = vadd.f32 %v344, %v339
        %346 = vst [vmem:[%s249] sm:$0xf] %v345
        %v347 = vld [vmem:[%s256] sm:$0xf]
        %v348 = vadd.f32 %v347, %v343
        %349 = vst [vmem:[%s256] sm:$0xf] %v348
        %s350 = sand.u32 %s103, 1
        %s351 = scalar_lea.sflag [#allocation4], %s350
        %s352 = sand.u32 %s103, 1
        %s353 = smul.addr %s352, 4
        %s354 = scalar_lea.vmem [#allocation7], %s353
        %s355 = sand.u32 %s129, 1
        %s356 = scalar_lea.sflag [#allocation9], %s355
        %s357 = sand.u32 %s129, 1
        %s358 = smul.addr %s357, 4
        %s359 = scalar_lea.vmem [#allocation8], %s358
        // Predicated region
        $region41: #{tpu_custom_call.1} parent=27 // pred_check
          %p360 = pneg %p113
        $region42: #{tpu_custom_call.1} parent=27 // pred_check_branch
          %362 = sbr.rel (%p360) target = $region44
        $region43: #{tpu_custom_call.1} parent=27 // pred_region
          %364 = vsyncadd %s351, 0
          %s365 = smul.addr %s31, 4
          %s366 = scalar_lea.hbm %s2, %s365
          %s368 = sshll.u32 %s354, 4
          %s369 = int_to_ptr.vmem [resolvable:$true] %s368
          %s370 = sshll.u32 %s366, 4
          %s371 = int_to_ptr.hbm [resolvable:$true] %s370
          %373 = dma.vmem_to_hbm [thread:$0]  %s369, 64, %s371, %s351
        $region44: #{tpu_custom_call.1} parent=27 // pred_fallthru
          _
        // Predicated region
        $region45: #{tpu_custom_call.1} parent=27 // pred_check
          %p374 = pneg %p139
        $region46: #{tpu_custom_call.1} parent=27 // pred_check_branch
          %376 = sbr.rel (%p374) target = $region48
        $region47: #{tpu_custom_call.1} parent=27 // pred_region
          %378 = vsyncadd %s356, 0
          %s379 = smul.addr %s31, 4
          %s380 = scalar_lea.hbm %s3, %s379
          %s382 = sshll.u32 %s359, 4
          %s383 = int_to_ptr.vmem [resolvable:$true] %s382
          %s384 = sshll.u32 %s380, 4
          %s385 = int_to_ptr.hbm [resolvable:$true] %s384
          %387 = dma.vmem_to_hbm [thread:$0]  %s383, 64, %s385, %s356
        $region48: #{tpu_custom_call.1} parent=27 // pred_fallthru
          _
      $region28: #{tpu_custom_call.1} parent=5 // pred_fallthru
        _
      %p388 = scmp.le.s32.totalorder 2, %s22
      // Predicated region
      $region49: #{tpu_custom_call.1} parent=5 // pred_check
        %p389 = pneg %p388
      $region50: #{tpu_custom_call.1} parent=5 // pred_check_branch
        %391 = sbr.rel (%p389) target = $region52
      $region51: #{tpu_custom_call.1} parent=5 // pred_region
        %s392 = ssub.s32 %s22, 2
        // Predicated region
        $region53: #{tpu_custom_call.1} parent=51 // pred_check
          %p393 = pneg %p119
        $region54: #{tpu_custom_call.1} parent=51 // pred_check_branch
          %395 = sbr.rel (%p393) target = $region56
        $region55: #{tpu_custom_call.1} parent=51 // pred_region
          %s396 = sand.u32 %s104, 1
          %s397 = scalar_lea.sflag [#allocation4], %s396
          %s398 = sand.u32 %s104, 1
          %s399 = smul.addr %s398, 4
          %s400 = scalar_lea.vmem [#allocation7], %s399
          %402 = dma.done %s397, 64
        $region56: #{tpu_custom_call.1} parent=51 // pred_fallthru
          _
        // Predicated region
        $region57: #{tpu_custom_call.1} parent=51 // pred_check
          %p403 = pneg %p145
        $region58: #{tpu_custom_call.1} parent=51 // pred_check_branch
          %405 = sbr.rel (%p403) target = $region60
        $region59: #{tpu_custom_call.1} parent=51 // pred_region
          %s406 = sand.u32 %s130, 1
          %s407 = scalar_lea.sflag [#allocation9], %s406
          %s408 = sand.u32 %s130, 1
          %s409 = smul.addr %s408, 4
          %s410 = scalar_lea.vmem [#allocation8], %s409
          %412 = dma.done %s407, 64
        $region60: #{tpu_custom_call.1} parent=51 // pred_fallthru
          _
      $region52: #{tpu_custom_call.1} parent=5 // pred_fallthru
        _
    $region6: #{tpu_custom_call.1} parent=1 // loop_footer
      %s26 = sadd.s32 1, %s22
    $region7: #{tpu_custom_call.1} parent=1 // loop_footer_branch
      %21 = sbr.rel target = $region3
    $region8: #{tpu_custom_call.1} parent=1 // loop_exit
      _
    %413 = vsyncpa [#allocation3], 1
    %s414 = scalar_lea.sflag [#allocation3], 1
    %415 = vsyncpa %s414, 1
    %416 = vsyncpa [#allocation6], 1
    %s417 = scalar_lea.sflag [#allocation6], 1
    %418 = vsyncpa %s417, 1
    %419 = vsyncpa [#allocation4], 1
    %s420 = scalar_lea.sflag [#allocation4], 1
    %421 = vsyncpa %s420, 1
    %422 = vsyncpa [#allocation9], 1
    %s423 = scalar_lea.sflag [#allocation9], 1
    %424 = vsyncpa %s423, 1

</llo_original>
